<compile_context>
chip_gen: v5e
topology: v5e:2x2
jax: 0.10.0
libtpu: 0.0.40
codegen_flags: <defaults>
</compile_context>

<pallas_src>
import jax
import jax.numpy as jnp
from jax.experimental import pallas as pl
from jax.experimental.pallas import tpu as pltpu

EPS = 1e-5  # BatchNorm1d default eps


def _round_up(n, m):
    return (n + m - 1) // m * m


def _pad_axis(x, axis, target):
    pad = target - x.shape[axis]
    if pad <= 0:
        return x
    widths = [(0, 0)] * x.ndim
    widths[axis] = (0, pad)
    return jnp.pad(x, widths)


def simclr_kernel(q_ref, f_ref,
                  mw_ref, mb_ref,
                  ew1_ref, bn1g_ref, bn1b_ref,
                  ew2_ref, eb2_ref, bn2g_ref, bn2b_ref,
                  pw1_ref, pw2_ref,
                  h_ref, z_ref):
    q = q_ref[...]            # [B, D]  f32
    f = f_ref[...]            # [B, n, D] f32
    B = q.shape[0]
    n = f.shape[1]
    bf16 = jnp.bfloat16

    # ---- Merge_stacked (cross attention) --------------------------------------------
    logits = jnp.dot(q, mw_ref[...], preferred_element_type=jnp.float32) + mb_ref[...]   # [B, n]
    logits = logits - jnp.max(logits, axis=-1, keepdims=True)
    e = jnp.exp(logits)
    denom = jnp.sum(e, axis=-1, keepdims=True)
    alphas = e * pl.reciprocal(denom, approx=True)                                       # [B, n]

    # Static unrolled weighted sum over the (small) n_keys axis — pure VPU work,
    # avoids materializing [B, n, D] and the cross-sublane reduce.
    merged = alphas[:, 0:1] * f[:, 0, :]
    for k in range(1, n):
        merged = merged + alphas[:, k:k + 1] * f[:, k, :]                                # [B, D]

    # ---- Fused two-stream slab: rows [0:B] = queries, rows [B:2B] = merged -----------
    x = jnp.concatenate([q, merged], axis=0)                                             # [2B, D]

    def batchnorm(h, g, b):
        # Per-stream batch statistics (each stream keeps its own full-batch BN stats),
        # one-pass mean / var in f32.
        hp = h.shape[-1]
        h3 = h.reshape(2, B, hp)
        mean = jnp.mean(h3, axis=1, keepdims=True)                                       # [2,1,Hp]
        meansq = jnp.mean(h3 * h3, axis=1, keepdims=True)
        var = meansq - mean * mean                                                       # biased var
        h3 = (h3 - mean) * jax.lax.rsqrt(var + EPS) * g + b
        return h3.reshape(2 * B, hp)

    # ---- Encoder: fc1(no bias) -> bn1 -> relu -> fc2(+bias) -> bn2 -------------------
    h = jnp.dot(x.astype(bf16), ew1_ref[...], preferred_element_type=jnp.float32)        # [2B, Hp]
    h = batchnorm(h, bn1g_ref[...], bn1b_ref[...])
    h = jnp.maximum(h, 0.0)
    h = jnp.dot(h.astype(bf16), ew2_ref[...], preferred_element_type=jnp.float32) + eb2_ref[...]
    h = batchnorm(h, bn2g_ref[...], bn2b_ref[...])
    h_ref[...] = h.astype(h_ref.dtype)                                                   # lane-dense store

    # ---- Projector: fc1(no bias) -> relu -> fc2(no bias) -----------------------------
    z = jnp.dot(h.astype(bf16), pw1_ref[...], preferred_element_type=jnp.float32)        # [2B, Pp]
    z = jnp.maximum(z, 0.0)
    z = jnp.dot(z.astype(bf16), pw2_ref[...], preferred_element_type=jnp.float32)
    z_ref[...] = z.astype(z_ref.dtype)


def simclr_forward(queries, features, params):
    B, D = queries.shape
    n = features.shape[1]
    H = params["ew1"].shape[1]
    P = params["pw1"].shape[1]
    Hp = _round_up(H, 128)   # lane-dense hidden width
    Pp = _round_up(P, 128)   # lane-dense projection width
    bf16 = jnp.bfloat16

    # Zero-pad weights/affine params to lane-dense widths; matmul weights in bf16
    # (halves HBM->VMEM bytes), BN/bias params stay f32.
    mw = params["mw"]                                                 # [D, n] f32 (tiny)
    mb = params["mb"]                                                 # [1, n] f32
    ew1 = _pad_axis(params["ew1"], 1, Hp).astype(bf16)                # [D, Hp]
    bn1g = _pad_axis(params["bn1g"], 1, Hp)
    bn1b = _pad_axis(params["bn1b"], 1, Hp)
    ew2 = _pad_axis(_pad_axis(params["ew2"], 0, Hp), 1, Hp).astype(bf16)   # [Hp, Hp]
    eb2 = _pad_axis(params["eb2"], 1, Hp)
    bn2g = _pad_axis(params["bn2g"], 1, Hp)
    bn2b = _pad_axis(params["bn2b"], 1, Hp)
    pw1 = _pad_axis(_pad_axis(params["pw1"], 0, Hp), 1, Pp).astype(bf16)   # [Hp, Pp]
    pw2 = _pad_axis(_pad_axis(params["pw2"], 0, Pp), 1, Pp).astype(bf16)   # [Pp, Pp]

    args = (queries, features, mw, mb,
            ew1, bn1g, bn1b, ew2, eb2, bn2g, bn2b, pw1, pw2)

    vmem = pl.BlockSpec(memory_space=pltpu.MemorySpace.VMEM)

    flops = 2 * B * D * n + 2 * (2 * B) * (D * Hp + Hp * Hp + Hp * Pp + Pp * Pp)
    bytes_in = sum(int(a.size) * a.dtype.itemsize for a in args)
    bytes_out = 2 * B * (Hp + Pp) * 4
    transcendentals = B * (n + 1) + 4 * Hp   # exp + reciprocal + BN rsqrt (2 streams x 2 BNs)

    h_slab, z_slab = pl.pallas_call(
        simclr_kernel,
        out_shape=(jax.ShapeDtypeStruct((2 * B, Hp), jnp.float32),
                   jax.ShapeDtypeStruct((2 * B, Pp), jnp.float32)),
        in_specs=[vmem] * len(args),
        out_specs=(vmem, vmem),
        compiler_params=pltpu.CompilerParams(vmem_limit_bytes=32 * 1024 * 1024),
        cost_estimate=pl.CostEstimate(flops=flops,
                                      transcendentals=transcendentals,
                                      bytes_accessed=bytes_in + bytes_out),
    )(*args)

    h_i = h_slab[:B, :H]
    h_j = h_slab[B:, :H]
    z_i = z_slab[:B, :P]
    z_j = z_slab[B:, :P]
    return h_i, h_j, z_i, z_j


def reference_forward(queries, features, params):
    """Pure-JAX f32 reference with the module's math (for a sanity check)."""
    logits = queries @ params["mw"] + params["mb"]
    alphas = jax.nn.softmax(logits, axis=-1)
    merged = jnp.sum(alphas[:, :, None] * features, axis=1)

    def encode(x):
        h = x @ params["ew1"]
        mu, var = jnp.mean(h, 0, keepdims=True), jnp.var(h, 0, keepdims=True)
        h = (h - mu) / jnp.sqrt(var + EPS) * params["bn1g"] + params["bn1b"]
        h = jnp.maximum(h, 0.0)
        h = h @ params["ew2"] + params["eb2"]
        mu2, var2 = jnp.mean(h, 0, keepdims=True), jnp.var(h, 0, keepdims=True)
        return (h - mu2) / jnp.sqrt(var2 + EPS) * params["bn2g"] + params["bn2b"]

    def project(h):
        return jnp.maximum(h @ params["pw1"], 0.0) @ params["pw2"]

    h_i, h_j = encode(queries), encode(merged)
    return h_i, h_j, project(h_i), project(h_j)


def init_params(key, input_dim, hidden_dim, proj_dim, n_keys):
    ks = jax.random.split(key, 7)

    def unif(k, shape, fan_in):
        bound = 1.0 / jnp.sqrt(float(fan_in))
        return jax.random.uniform(k, shape, jnp.float32, -bound, bound)

    return dict(
        # Merge_stacked.fc : Linear(input_dim -> n_keys) with bias
        mw=unif(ks[0], (input_dim, n_keys), input_dim),
        mb=unif(ks[1], (1, n_keys), input_dim),
        # Encoder.fc1 (no bias), bn1, fc2 (+bias), bn2
        ew1=unif(ks[2], (input_dim, hidden_dim), input_dim),
        bn1g=jnp.ones((1, hidden_dim), jnp.float32),
        bn1b=jnp.zeros((1, hidden_dim), jnp.float32),
        ew2=unif(ks[3], (hidden_dim, hidden_dim), hidden_dim),
        eb2=unif(ks[4], (1, hidden_dim), hidden_dim),
        bn2g=jnp.ones((1, hidden_dim), jnp.float32),
        bn2b=jnp.zeros((1, hidden_dim), jnp.float32),
        # Projector: fc1 (no bias), fc2 (no bias)
        pw1=unif(ks[5], (hidden_dim, proj_dim), hidden_dim),
        pw2=unif(ks[6], (proj_dim, proj_dim), proj_dim),
    )


if __name__ == "__main__":
    B, INPUT_DIM, HIDDEN_DIM, PROJ_DIM = 8, 32, 32, 16
    KEYS = ["f_object", "f_celebrity", "f_logo", "f_action"]  # n_keys = 4

    key = jax.random.PRNGKey(0)
    kq, kf, kp = jax.random.split(key, 3)

    queries = jax.random.normal(kq, (B, INPUT_DIM), jnp.float32)
    features = jax.random.normal(kf, (B, len(KEYS), INPUT_DIM), jnp.float32)
    params = init_params(kp, INPUT_DIM, HIDDEN_DIM, PROJ_DIM, len(KEYS))

    outs = jax.block_until_ready(simclr_forward(queries, features, params))
    refs = reference_forward(queries, features, params)

    # bf16 matmuls + approx softmax reciprocal => tolerance loosened vs. f32 reference.
    for o, r in zip(outs, refs):
        assert o.shape == r.shape and o.dtype == r.dtype
        assert jnp.allclose(o, r, atol=5e-2, rtol=5e-2), float(jnp.max(jnp.abs(o - r)))

    print("KERNEL_OK")
</pallas_src>

<mosaic_0001>
module attributes {stable_mosaic.version = 11 : i64} {
  func.func @simclr_kernel(%arg0: memref<8x32xf32, #tpu.memory_space<vmem>>, %arg1: memref<8x4x32xf32, #tpu.memory_space<vmem>>, %arg2: memref<32x4xf32, #tpu.memory_space<vmem>>, %arg3: memref<1x4xf32, #tpu.memory_space<vmem>>, %arg4: memref<32x128xbf16, #tpu.memory_space<vmem>>, %arg5: memref<1x128xf32, #tpu.memory_space<vmem>>, %arg6: memref<1x128xf32, #tpu.memory_space<vmem>>, %arg7: memref<128x128xbf16, #tpu.memory_space<vmem>>, %arg8: memref<1x128xf32, #tpu.memory_space<vmem>>, %arg9: memref<1x128xf32, #tpu.memory_space<vmem>>, %arg10: memref<1x128xf32, #tpu.memory_space<vmem>>, %arg11: memref<128x128xbf16, #tpu.memory_space<vmem>>, %arg12: memref<128x128xbf16, #tpu.memory_space<vmem>>, %arg13: memref<16x128xf32, #tpu.memory_space<vmem>>, %arg14: memref<16x128xf32, #tpu.memory_space<vmem>>) attributes {dimension_semantics = [], scalar_prefetch = 0 : i64, scratch_operands = 0 : i64, tpu.core_type = #tpu.core_type<tc>} {
    %c0 = arith.constant 0 : index
    %c0_0 = arith.constant 0 : index
    %0 = vector.load %arg0[%c0, %c0_0] : memref<8x32xf32, #tpu.memory_space<vmem>>, vector<8x32xf32>
    %c0_1 = arith.constant 0 : index
    %c0_2 = arith.constant 0 : index
    %c0_3 = arith.constant 0 : index
    %1 = vector.load %arg1[%c0_1, %c0_2, %c0_3] : memref<8x4x32xf32, #tpu.memory_space<vmem>>, vector<8x4x32xf32>
    %c0_4 = arith.constant 0 : index
    %c0_5 = arith.constant 0 : index
    %2 = vector.load %arg2[%c0_4, %c0_5] : memref<32x4xf32, #tpu.memory_space<vmem>>, vector<32x4xf32>
    %cst = arith.constant dense<0.000000e+00> : vector<8x4xf32>
    %3 = tpu.matmul %0, %2, %cst {dimension_numbers = #tpu.dot_dimension_numbers<[1], [0], [0], [1], [0, 0, 1, 1], [], []>} : vector<8x32xf32>, vector<32x4xf32>, vector<8x4xf32> -> vector<8x4xf32>
    %c0_6 = arith.constant 0 : index
    %c0_7 = arith.constant 0 : index
    %4 = vector.load %arg3[%c0_6, %c0_7] : memref<1x4xf32, #tpu.memory_space<vmem>>, vector<1x4xf32>
    %5 = vector.broadcast %4 : vector<1x4xf32> to vector<8x4xf32>
    %6 = arith.addf %3, %5 : vector<8x4xf32>
    %cst_8 = arith.constant dense<0xFF800000> : vector<8xf32>
    %7 = vector.multi_reduction <maximumf>, %6, %cst_8 [1] : vector<8x4xf32> to vector<8xf32>
    %8 = vector.shape_cast %7 : vector<8xf32> to vector<8x1xf32>
    %9 = vector.broadcast %8 : vector<8x1xf32> to vector<8x4xf32>
    %10 = arith.subf %6, %9 : vector<8x4xf32>
    %11 = math.exp %10 : vector<8x4xf32>
    %cst_9 = arith.constant dense<0.000000e+00> : vector<8xf32>
    %12 = vector.multi_reduction <add>, %11, %cst_9 [1] : vector<8x4xf32> to vector<8xf32>
    %13 = vector.shape_cast %12 : vector<8xf32> to vector<8x1xf32>
    %14 = tpu.reciprocal %13 {approx = true} : vector<8x1xf32> -> vector<8x1xf32>
    %15 = vector.broadcast %14 : vector<8x1xf32> to vector<8x4xf32>
    %16 = arith.mulf %11, %15 : vector<8x4xf32>
    %17 = vector.extract_strided_slice %16 {offsets = [0, 0], sizes = [8, 1], strides = [1, 1]} : vector<8x4xf32> to vector<8x1xf32>
    %18 = vector.extract_strided_slice %1 {offsets = [0, 0, 0], sizes = [8, 1, 32], strides = [1, 1, 1]} : vector<8x4x32xf32> to vector<8x1x32xf32>
    %19 = vector.shape_cast %18 : vector<8x1x32xf32> to vector<8x32xf32>
    %20 = vector.broadcast %17 : vector<8x1xf32> to vector<8x32xf32>
    %21 = arith.mulf %20, %19 : vector<8x32xf32>
    %22 = vector.extract_strided_slice %16 {offsets = [0, 1], sizes = [8, 1], strides = [1, 1]} : vector<8x4xf32> to vector<8x1xf32>
    %23 = vector.extract_strided_slice %1 {offsets = [0, 1, 0], sizes = [8, 1, 32], strides = [1, 1, 1]} : vector<8x4x32xf32> to vector<8x1x32xf32>
    %24 = vector.shape_cast %23 : vector<8x1x32xf32> to vector<8x32xf32>
    %25 = vector.broadcast %22 : vector<8x1xf32> to vector<8x32xf32>
    %26 = arith.mulf %25, %24 : vector<8x32xf32>
    %27 = arith.addf %21, %26 : vector<8x32xf32>
    %28 = vector.extract_strided_slice %16 {offsets = [0, 2], sizes = [8, 1], strides = [1, 1]} : vector<8x4xf32> to vector<8x1xf32>
    %29 = vector.extract_strided_slice %1 {offsets = [0, 2, 0], sizes = [8, 1, 32], strides = [1, 1, 1]} : vector<8x4x32xf32> to vector<8x1x32xf32>
    %30 = vector.shape_cast %29 : vector<8x1x32xf32> to vector<8x32xf32>
    %31 = vector.broadcast %28 : vector<8x1xf32> to vector<8x32xf32>
    %32 = arith.mulf %31, %30 : vector<8x32xf32>
    %33 = arith.addf %27, %32 : vector<8x32xf32>
    %34 = vector.extract_strided_slice %16 {offsets = [0, 3], sizes = [8, 1], strides = [1, 1]} : vector<8x4xf32> to vector<8x1xf32>
    %35 = vector.extract_strided_slice %1 {offsets = [0, 3, 0], sizes = [8, 1, 32], strides = [1, 1, 1]} : vector<8x4x32xf32> to vector<8x1x32xf32>
    %36 = vector.shape_cast %35 : vector<8x1x32xf32> to vector<8x32xf32>
    %37 = vector.broadcast %34 : vector<8x1xf32> to vector<8x32xf32>
    %38 = arith.mulf %37, %36 : vector<8x32xf32>
    %39 = arith.addf %33, %38 : vector<8x32xf32>
    %40 = tpu.concatenate %0, %39 in 0 : vector<8x32xf32>, vector<8x32xf32> -> vector<16x32xf32>
    %41 = arith.truncf %40 : vector<16x32xf32> to vector<16x32xbf16>
    %c0_10 = arith.constant 0 : index
    %c0_11 = arith.constant 0 : index
    %42 = vector.load %arg4[%c0_10, %c0_11] : memref<32x128xbf16, #tpu.memory_space<vmem>>, vector<32x128xbf16>
    %cst_12 = arith.constant dense<0.000000e+00> : vector<16x128xf32>
    %43 = tpu.matmul %41, %42, %cst_12 {dimension_numbers = #tpu.dot_dimension_numbers<[1], [0], [0], [1], [0, 0, 1, 1], [], []>} : vector<16x32xbf16>, vector<32x128xbf16>, vector<16x128xf32> -> vector<16x128xf32>
    %c0_13 = arith.constant 0 : index
    %c0_14 = arith.constant 0 : index
    %44 = vector.load %arg5[%c0_13, %c0_14] : memref<1x128xf32, #tpu.memory_space<vmem>>, vector<1x128xf32>
    %c0_15 = arith.constant 0 : index
    %c0_16 = arith.constant 0 : index
    %45 = vector.load %arg6[%c0_15, %c0_16] : memref<1x128xf32, #tpu.memory_space<vmem>>, vector<1x128xf32>
    %46 = vector.shape_cast %43 : vector<16x128xf32> to vector<2x8x128xf32>
    %cst_17 = arith.constant dense<0.000000e+00> : vector<2x128xf32>
    %47 = vector.multi_reduction <add>, %46, %cst_17 [1] : vector<2x8x128xf32> to vector<2x128xf32>
    %48 = vector.shape_cast %47 : vector<2x128xf32> to vector<2x1x128xf32>
    %cst_18 = arith.constant 8.000000e+00 : f32
    %49 = vector.broadcast %cst_18 : f32 to vector<2x1x128xf32>
    %50 = arith.divf %48, %49 : vector<2x1x128xf32>
    %51 = arith.mulf %46, %46 : vector<2x8x128xf32>
    %cst_19 = arith.constant dense<0.000000e+00> : vector<2x128xf32>
    %52 = vector.multi_reduction <add>, %51, %cst_19 [1] : vector<2x8x128xf32> to vector<2x128xf32>
    %53 = vector.shape_cast %52 : vector<2x128xf32> to vector<2x1x128xf32>
    %cst_20 = arith.constant 8.000000e+00 : f32
    %54 = vector.broadcast %cst_20 : f32 to vector<2x1x128xf32>
    %55 = arith.divf %53, %54 : vector<2x1x128xf32>
    %56 = arith.mulf %50, %50 : vector<2x1x128xf32>
    %57 = arith.subf %55, %56 : vector<2x1x128xf32>
    %58 = vector.broadcast %50 : vector<2x1x128xf32> to vector<2x8x128xf32>
    %59 = arith.subf %46, %58 : vector<2x8x128xf32>
    %cst_21 = arith.constant 9.99999974E-6 : f32
    %60 = vector.broadcast %cst_21 : f32 to vector<2x1x128xf32>
    %61 = arith.addf %57, %60 : vector<2x1x128xf32>
    %62 = math.rsqrt %61 : vector<2x1x128xf32>
    %63 = vector.broadcast %62 : vector<2x1x128xf32> to vector<2x8x128xf32>
    %64 = arith.mulf %59, %63 : vector<2x8x128xf32>
    %65 = vector.shape_cast %44 : vector<1x128xf32> to vector<1x1x128xf32>
    %66 = vector.broadcast %65 : vector<1x1x128xf32> to vector<2x8x128xf32>
    %67 = arith.mulf %64, %66 : vector<2x8x128xf32>
    %68 = vector.shape_cast %45 : vector<1x128xf32> to vector<1x1x128xf32>
    %69 = vector.broadcast %68 : vector<1x1x128xf32> to vector<2x8x128xf32>
    %70 = arith.addf %67, %69 : vector<2x8x128xf32>
    %71 = vector.shape_cast %70 : vector<2x8x128xf32> to vector<16x128xf32>
    %cst_22 = arith.constant 0.000000e+00 : f32
    %72 = vector.broadcast %cst_22 : f32 to vector<16x128xf32>
    %73 = arith.maximumf %71, %72 : vector<16x128xf32>
    %74 = arith.truncf %73 : vector<16x128xf32> to vector<16x128xbf16>
    %c0_23 = arith.constant 0 : index
    %c0_24 = arith.constant 0 : index
    %75 = vector.load %arg7[%c0_23, %c0_24] : memref<128x128xbf16, #tpu.memory_space<vmem>>, vector<128x128xbf16>
    %cst_25 = arith.constant dense<0.000000e+00> : vector<16x128xf32>
    %76 = tpu.matmul %74, %75, %cst_25 {dimension_numbers = #tpu.dot_dimension_numbers<[1], [0], [0], [1], [0, 0, 1, 1], [], []>} : vector<16x128xbf16>, vector<128x128xbf16>, vector<16x128xf32> -> vector<16x128xf32>
    %c0_26 = arith.constant 0 : index
    %c0_27 = arith.constant 0 : index
    %77 = vector.load %arg8[%c0_26, %c0_27] : memref<1x128xf32, #tpu.memory_space<vmem>>, vector<1x128xf32>
    %78 = vector.broadcast %77 : vector<1x128xf32> to vector<16x128xf32>
    %79 = arith.addf %76, %78 : vector<16x128xf32>
    %c0_28 = arith.constant 0 : index
    %c0_29 = arith.constant 0 : index
    %80 = vector.load %arg9[%c0_28, %c0_29] : memref<1x128xf32, #tpu.memory_space<vmem>>, vector<1x128xf32>
    %c0_30 = arith.constant 0 : index
    %c0_31 = arith.constant 0 : index
    %81 = vector.load %arg10[%c0_30, %c0_31] : memref<1x128xf32, #tpu.memory_space<vmem>>, vector<1x128xf32>
    %82 = vector.shape_cast %79 : vector<16x128xf32> to vector<2x8x128xf32>
    %cst_32 = arith.constant dense<0.000000e+00> : vector<2x128xf32>
    %83 = vector.multi_reduction <add>, %82, %cst_32 [1] : vector<2x8x128xf32> to vector<2x128xf32>
    %84 = vector.shape_cast %83 : vector<2x128xf32> to vector<2x1x128xf32>
    %cst_33 = arith.constant 8.000000e+00 : f32
    %85 = vector.broadcast %cst_33 : f32 to vector<2x1x128xf32>
    %86 = arith.divf %84, %85 : vector<2x1x128xf32>
    %87 = arith.mulf %82, %82 : vector<2x8x128xf32>
    %cst_34 = arith.constant dense<0.000000e+00> : vector<2x128xf32>
    %88 = vector.multi_reduction <add>, %87, %cst_34 [1] : vector<2x8x128xf32> to vector<2x128xf32>
    %89 = vector.shape_cast %88 : vector<2x128xf32> to vector<2x1x128xf32>
    %cst_35 = arith.constant 8.000000e+00 : f32
    %90 = vector.broadcast %cst_35 : f32 to vector<2x1x128xf32>
    %91 = arith.divf %89, %90 : vector<2x1x128xf32>
    %92 = arith.mulf %86, %86 : vector<2x1x128xf32>
    %93 = arith.subf %91, %92 : vector<2x1x128xf32>
    %94 = vector.broadcast %86 : vector<2x1x128xf32> to vector<2x8x128xf32>
    %95 = arith.subf %82, %94 : vector<2x8x128xf32>
    %cst_36 = arith.constant 9.99999974E-6 : f32
    %96 = vector.broadcast %cst_36 : f32 to vector<2x1x128xf32>
    %97 = arith.addf %93, %96 : vector<2x1x128xf32>
    %98 = math.rsqrt %97 : vector<2x1x128xf32>
    %99 = vector.broadcast %98 : vector<2x1x128xf32> to vector<2x8x128xf32>
    %100 = arith.mulf %95, %99 : vector<2x8x128xf32>
    %101 = vector.shape_cast %80 : vector<1x128xf32> to vector<1x1x128xf32>
    %102 = vector.broadcast %101 : vector<1x1x128xf32> to vector<2x8x128xf32>
    %103 = arith.mulf %100, %102 : vector<2x8x128xf32>
    %104 = vector.shape_cast %81 : vector<1x128xf32> to vector<1x1x128xf32>
    %105 = vector.broadcast %104 : vector<1x1x128xf32> to vector<2x8x128xf32>
    %106 = arith.addf %103, %105 : vector<2x8x128xf32>
    %107 = vector.shape_cast %106 : vector<2x8x128xf32> to vector<16x128xf32>
    %c0_37 = arith.constant 0 : index
    %c0_38 = arith.constant 0 : index
    %108 = vector.load %arg13[%c0_37, %c0_38] : memref<16x128xf32, #tpu.memory_space<vmem>>, vector<16x128xf32>
    tpu.vector_store %arg13[%c0_37, %c0_38], %107 {strides = array<i32>} : memref<16x128xf32, #tpu.memory_space<vmem>>, vector<16x128xf32>,
    %109 = arith.truncf %107 : vector<16x128xf32> to vector<16x128xbf16>
    %c0_39 = arith.constant 0 : index
    %c0_40 = arith.constant 0 : index
    %110 = vector.load %arg11[%c0_39, %c0_40] : memref<128x128xbf16, #tpu.memory_space<vmem>>, vector<128x128xbf16>
    %cst_41 = arith.constant dense<0.000000e+00> : vector<16x128xf32>
    %111 = tpu.matmul %109, %110, %cst_41 {dimension_numbers = #tpu.dot_dimension_numbers<[1], [0], [0], [1], [0, 0, 1, 1], [], []>} : vector<16x128xbf16>, vector<128x128xbf16>, vector<16x128xf32> -> vector<16x128xf32>
    %cst_42 = arith.constant 0.000000e+00 : f32
    %112 = vector.broadcast %cst_42 : f32 to vector<16x128xf32>
    %113 = arith.maximumf %111, %112 : vector<16x128xf32>
    %114 = arith.truncf %113 : vector<16x128xf32> to vector<16x128xbf16>
    %c0_43 = arith.constant 0 : index
    %c0_44 = arith.constant 0 : index
    %115 = vector.load %arg12[%c0_43, %c0_44] : memref<128x128xbf16, #tpu.memory_space<vmem>>, vector<128x128xbf16>
    %cst_45 = arith.constant dense<0.000000e+00> : vector<16x128xf32>
    %116 = tpu.matmul %114, %115, %cst_45 {dimension_numbers = #tpu.dot_dimension_numbers<[1], [0], [0], [1], [0, 0, 1, 1], [], []>} : vector<16x128xbf16>, vector<128x128xbf16>, vector<16x128xf32> -> vector<16x128xf32>
    %c0_46 = arith.constant 0 : index
    %c0_47 = arith.constant 0 : index
    %117 = vector.load %arg14[%c0_46, %c0_47] : memref<16x128xf32, #tpu.memory_space<vmem>>, vector<16x128xf32>
    tpu.vector_store %arg14[%c0_46, %c0_47], %116 {strides = array<i32>} : memref<16x128xf32, #tpu.memory_space<vmem>>, vector<16x128xf32>,
    return
  }
}

</mosaic_0001>

<llo_original>
// kernel: tpu_custom_call.1
$region0: #{tpu_custom_call.1}
  #allocation0 [shape = 'u32[]', space=smem, size = 0x4, offset = 0x4, fixed_abs, tag = 'smem constant byte address 0x4 - core index']
  #allocation1 [shape = 'u32[72,128]{1,0:T(1,128)}', space=vmem, size = 0x9000, scoped, tag = 'internal scratch']
  %s0 = inlined_call_operand.hbm [shape: f32[8,32], index: 0, kind: input, shape index: {}]
  %s1 = inlined_call_operand.vmem [shape: f32[8,4,32], index: 1, kind: input, shape index: {}]
  %s2 = inlined_call_operand.vmem [shape: f32[32,4], index: 2, kind: input, shape index: {}]
  %s3 = inlined_call_operand.vmem [shape: f32[1,4], index: 3, kind: input, shape index: {}]
  %s4 = inlined_call_operand.hbm [shape: bf16[32,128], index: 4, kind: input, shape index: {}]
  %s5 = inlined_call_operand.vmem [shape: f32[1,128], index: 5, kind: input, shape index: {}]
  %s6 = inlined_call_operand.vmem [shape: f32[1,128], index: 6, kind: input, shape index: {}]
  %s7 = inlined_call_operand.hbm [shape: bf16[128,128], index: 7, kind: input, shape index: {}]
  %s8 = inlined_call_operand.vmem [shape: f32[1,128], index: 8, kind: input, shape index: {}]
  %s9 = inlined_call_operand.vmem [shape: f32[1,128], index: 9, kind: input, shape index: {}]
  %s10 = inlined_call_operand.vmem [shape: f32[1,128], index: 10, kind: input, shape index: {}]
  %s11 = inlined_call_operand.hbm [shape: bf16[128,128], index: 11, kind: input, shape index: {}]
  %s12 = inlined_call_operand.hbm [shape: bf16[128,128], index: 12, kind: input, shape index: {}]
  %s13 = inlined_call_operand.hbm [shape: f32[16,128], index: 13, kind: output, shape index: {0}]
  %s14 = inlined_call_operand.hbm [shape: f32[16,128], index: 14, kind: output, shape index: {1}]
  %15 = xla_tuple %s13, %s14
  %s16 = sld [smem:[#allocation0]]
  $region90: #{tpu_custom_call.1} parent=0
    _
  %s18 = ssub.s32 1, %s16
  %s19 = scalar_select 0, %s18, %s16
  $region1: #{tpu_custom_call.1} parent=0
    #allocation2 [shape = 'u8[4096]{0}', space=vmem, size = 0x1000, scoped, tag = 'input window, operand 0, single buffered']
    #allocation3 [shape = 's32[1]{0}', space=sflag, size = 0x4, scoped, tag = 'scoped memory for tpu_custom_call.1']
    #allocation4 [shape = 's32[1]{0}', space=sflag, size = 0x4, scoped, tag = 'scoped memory for tpu_custom_call.1']
    #allocation5 [shape = 'u8[8192]{0}', space=vmem, size = 0x2000, scoped, tag = 'input window, operand 4, single buffered']
    #allocation6 [shape = 's32[1]{0}', space=sflag, size = 0x4, scoped, tag = 'scoped memory for tpu_custom_call.1']
    #allocation7 [shape = 'u8[32768]{0}', space=vmem, size = 0x8000, scoped, tag = 'input window, operand 7, single buffered']
    #allocation8 [shape = 'u8[32768]{0}', space=vmem, size = 0x8000, scoped, tag = 'input window, operand 11, single buffered']
    #allocation9 [shape = 's32[1]{0}', space=sflag, size = 0x4, scoped, tag = 'scoped memory for tpu_custom_call.1']
    #allocation10 [shape = 'u8[32768]{0}', space=vmem, size = 0x8000, scoped, tag = 'input window, operand 12, single buffered']
    #allocation11 [shape = 'u8[8192]{0}', space=vmem, size = 0x2000, scoped, tag = 'output window, operand 0, single buffered']
    #allocation12 [shape = 'u8[8192]{0}', space=vmem, size = 0x2000, scoped, tag = 'output window, operand 1, single buffered']
    #allocation13 [shape = 's32[1]{0}', space=sflag, size = 0x4, scoped, tag = 'scoped memory for tpu_custom_call.1']
    %20 = vsyncpa [#allocation3], 0
    %21 = vsyncpa [#allocation6], 0
    %22 = vsyncpa [#allocation9], 0
    %23 = vsyncpa [#allocation4], 0
    %24 = vsyncpa [#allocation13], 0
    // Predicated region
    $region2: #{tpu_custom_call.1} parent=1 // pred_check
      _
    $region3: #{tpu_custom_call.1} parent=1 // pred_check_branch
      %26 = sbr.rel (0) target = $region5
    $region4: #{tpu_custom_call.1} parent=1 // pred_region
      %28 = vsyncadd [#allocation3], 0
      %s30 = sshll.u32 %s0, 4
      %s31 = int_to_ptr.hbm [resolvable:$true] %s30
      %s32 = sshll.u32 [#allocation2], 4
      %s33 = int_to_ptr.vmem [resolvable:$true] %s32
      %35 = dma.hbm_to_vmem [thread:$0]  %s31, 128, %s33, [#allocation3]
    $region5: #{tpu_custom_call.1} parent=1 // pred_fallthru
      _
    // Predicated region
    $region6: #{tpu_custom_call.1} parent=1 // pred_check
      _
    $region7: #{tpu_custom_call.1} parent=1 // pred_check_branch
      %37 = sbr.rel (0) target = $region9
    $region8: #{tpu_custom_call.1} parent=1 // pred_region
      _
    $region9: #{tpu_custom_call.1} parent=1 // pred_fallthru
      _
    // Predicated region
    $region10: #{tpu_custom_call.1} parent=1 // pred_check
      _
    $region11: #{tpu_custom_call.1} parent=1 // pred_check_branch
      %39 = sbr.rel (0) target = $region13
    $region12: #{tpu_custom_call.1} parent=1 // pred_region
      _
    $region13: #{tpu_custom_call.1} parent=1 // pred_fallthru
      _
    // Predicated region
    $region14: #{tpu_custom_call.1} parent=1 // pred_check
      _
    $region15: #{tpu_custom_call.1} parent=1 // pred_check_branch
      %41 = sbr.rel (0) target = $region17
    $region16: #{tpu_custom_call.1} parent=1 // pred_region
      _
    $region17: #{tpu_custom_call.1} parent=1 // pred_fallthru
      _
    // Predicated region
    $region18: #{tpu_custom_call.1} parent=1 // pred_check
      _
    $region19: #{tpu_custom_call.1} parent=1 // pred_check_branch
      %43 = sbr.rel (0) target = $region21
    $region20: #{tpu_custom_call.1} parent=1 // pred_region
      %45 = vsyncadd [#allocation6], 0
      %s46 = sshll.u32 %s4, 4
      %s47 = int_to_ptr.hbm [resolvable:$true] %s46
      %s48 = sshll.u32 [#allocation5], 4
      %s49 = int_to_ptr.vmem [resolvable:$true] %s48
      %54 = dma.hbm_to_vmem [thread:$0]  %s47, 256, %s49, [#allocation6], 64, 64, 4
    $region21: #{tpu_custom_call.1} parent=1 // pred_fallthru
      _
    // Predicated region
    $region22: #{tpu_custom_call.1} parent=1 // pred_check
      _
    $region23: #{tpu_custom_call.1} parent=1 // pred_check_branch
      %56 = sbr.rel (0) target = $region25
    $region24: #{tpu_custom_call.1} parent=1 // pred_region
      _
    $region25: #{tpu_custom_call.1} parent=1 // pred_fallthru
      _
    // Predicated region
    $region26: #{tpu_custom_call.1} parent=1 // pred_check
      _
    $region27: #{tpu_custom_call.1} parent=1 // pred_check_branch
      %58 = sbr.rel (0) target = $region29
    $region28: #{tpu_custom_call.1} parent=1 // pred_region
      _
    $region29: #{tpu_custom_call.1} parent=1 // pred_fallthru
      _
    // Predicated region
    $region30: #{tpu_custom_call.1} parent=1 // pred_check
      _
    $region31: #{tpu_custom_call.1} parent=1 // pred_check_branch
      %60 = sbr.rel (0) target = $region33
    $region32: #{tpu_custom_call.1} parent=1 // pred_region
      %62 = vsyncadd [#allocation6], 0
      %s63 = sshll.u32 %s7, 4
      %s64 = int_to_ptr.hbm [resolvable:$true] %s63
      %s65 = sshll.u32 [#allocation7], 4
      %s66 = int_to_ptr.vmem [resolvable:$true] %s65
      %71 = dma.hbm_to_vmem [thread:$0]  %s64, 1024, %s66, [#allocation6], 64, 64, 4
    $region33: #{tpu_custom_call.1} parent=1 // pred_fallthru
      _
    // Predicated region
    $region34: #{tpu_custom_call.1} parent=1 // pred_check
      _
    $region35: #{tpu_custom_call.1} parent=1 // pred_check_branch
      %73 = sbr.rel (0) target = $region37
    $region36: #{tpu_custom_call.1} parent=1 // pred_region
      _
    $region37: #{tpu_custom_call.1} parent=1 // pred_fallthru
      _
    // Predicated region
    $region38: #{tpu_custom_call.1} parent=1 // pred_check
      _
    $region39: #{tpu_custom_call.1} parent=1 // pred_check_branch
      %75 = sbr.rel (0) target = $region41
    $region40: #{tpu_custom_call.1} parent=1 // pred_region
      _
    $region41: #{tpu_custom_call.1} parent=1 // pred_fallthru
      _
    // Predicated region
    $region42: #{tpu_custom_call.1} parent=1 // pred_check
      _
    $region43: #{tpu_custom_call.1} parent=1 // pred_check_branch
      %77 = sbr.rel (0) target = $region45
    $region44: #{tpu_custom_call.1} parent=1 // pred_region
      _
    $region45: #{tpu_custom_call.1} parent=1 // pred_fallthru
      _
    // Predicated region
    $region46: #{tpu_custom_call.1} parent=1 // pred_check
      _
    $region47: #{tpu_custom_call.1} parent=1 // pred_check_branch
      %79 = sbr.rel (0) target = $region49
    $region48: #{tpu_custom_call.1} parent=1 // pred_region
      %81 = vsyncadd [#allocation9], 0
      %s82 = sshll.u32 %s11, 4
      %s83 = int_to_ptr.hbm [resolvable:$true] %s82
      %s84 = sshll.u32 [#allocation8], 4
      %s85 = int_to_ptr.vmem [resolvable:$true] %s84
      %90 = dma.hbm_to_vmem [thread:$0]  %s83, 1024, %s85, [#allocation9], 64, 64, 4
    $region49: #{tpu_custom_call.1} parent=1 // pred_fallthru
      _
    // Predicated region
    $region50: #{tpu_custom_call.1} parent=1 // pred_check
      _
    $region51: #{tpu_custom_call.1} parent=1 // pred_check_branch
      %92 = sbr.rel (0) target = $region53
    $region52: #{tpu_custom_call.1} parent=1 // pred_region
      %94 = vsyncadd [#allocation9], 0
      %s95 = sshll.u32 %s12, 4
      %s96 = int_to_ptr.hbm [resolvable:$true] %s95
      %s97 = sshll.u32 [#allocation10], 4
      %s98 = int_to_ptr.vmem [resolvable:$true] %s97
      %103 = dma.hbm_to_vmem [thread:$0]  %s96, 1024, %s98, [#allocation9], 64, 64, 4
    $region53: #{tpu_custom_call.1} parent=1 // pred_fallthru
      _
    // Predicated region
    $region54: #{tpu_custom_call.1} parent=1 // pred_check
      _
    $region55: #{tpu_custom_call.1} parent=1 // pred_check_branch
      %105 = sbr.rel (0) target = $region57
    $region56: #{tpu_custom_call.1} parent=1 // pred_region
      %107 = dma.done [#allocation3], 128
    $region57: #{tpu_custom_call.1} parent=1 // pred_fallthru
      _
    // Predicated region
    $region58: #{tpu_custom_call.1} parent=1 // pred_check
      _
    $region59: #{tpu_custom_call.1} parent=1 // pred_check_branch
      %109 = sbr.rel (0) target = $region61
    $region60: #{tpu_custom_call.1} parent=1 // pred_region
      %111 = dma.done [#allocation6], 256
    $region61: #{tpu_custom_call.1} parent=1 // pred_fallthru
      _
    // Predicated region
    $region62: #{tpu_custom_call.1} parent=1 // pred_check
      _
    $region63: #{tpu_custom_call.1} parent=1 // pred_check_branch
      %113 = sbr.rel (0) target = $region65
    $region64: #{tpu_custom_call.1} parent=1 // pred_region
      %115 = dma.done [#allocation6], 1024
    $region65: #{tpu_custom_call.1} parent=1 // pred_fallthru
      _
    // Predicated region
    $region66: #{tpu_custom_call.1} parent=1 // pred_check
      _
    $region67: #{tpu_custom_call.1} parent=1 // pred_check_branch
      %117 = sbr.rel (0) target = $region69
    $region68: #{tpu_custom_call.1} parent=1 // pred_region
      %119 = dma.done [#allocation9], 1024
    $region69: #{tpu_custom_call.1} parent=1 // pred_fallthru
      _
    // Predicated region
    $region70: #{tpu_custom_call.1} parent=1 // pred_check
      _
    $region71: #{tpu_custom_call.1} parent=1 // pred_check_branch
      %121 = sbr.rel (0) target = $region73
    $region72: #{tpu_custom_call.1} parent=1 // pred_region
      %123 = dma.done [#allocation9], 1024
    $region73: #{tpu_custom_call.1} parent=1 // pred_fallthru
      _
    %v125 = vld [vmem:[#allocation2] sm:$0xff]
    %v126 = vld [vmem:[%s1] sm:$0xf]
    %v127 = vld [vmem:[%s1 + $0x4] sm:$0xf]
    %v128 = vld [vmem:[%s1 + $0x8] sm:$0xf]
    %v129 = vld [vmem:[%s1 + $0xc] sm:$0xf]
    %v130 = vld [vmem:[%s1 + $0x10] sm:$0xf]
    %v131 = vld [vmem:[%s1 + $0x14] sm:$0xf]
    %v132 = vld [vmem:[%s1 + $0x18] sm:$0xf]
    %v133 = vld [vmem:[%s1 + $0x1c] sm:$0xf]
    %v134 = vld [vmem:[%s2] sm:$0xff]
    %v135 = vld [vmem:[%s2 + $0x8] sm:$0xff]
    %v136 = vld [vmem:[%s2 + $0x10] sm:$0xff]
    %v137 = vld [vmem:[%s2 + $0x18] sm:$0xff]
    %v138 = vld [vmem:[%s3] sm:$0x1]
    %v140 = vperm.slane %v138, 0
    %vm142 = vcmask 261120
    %v144 = vsel %vm142, %v125, 0
    %146 = vmatpush.msra.mxu0 0.0
    %147 = vmatpush.msra.mxu0 0.0
    %148 = vmatpush.msra.mxu0 0.0
    %149 = vmatpush.msra.mxu0 0.0
    %150 = vmatpush.msra.mxu0 0.0
    %151 = vmatpush.msra.mxu0 0.0
    %152 = vmatpush.msra.mxu0 0.0
    %153 = vmatpush.msra.mxu0 0.0
    %154 = vmatpush.msra.mxu0 0.0
    %155 = vmatpush.msra.mxu0 0.0
    %156 = vmatpush.msra.mxu0 0.0
    %157 = vmatpush.msra.mxu0 0.0
    %158 = vmatpush.msra.mxu0 %v137
    %159 = vmatpush.msra.mxu0 %v136
    %160 = vmatpush.msra.mxu0 %v135
    %161 = vmatpush.msra.mxu0 %v134
    %162 = vmatmul.f32.gmra.mxu0 %v144
    %v163 = vpop.f32.mrf.mxu0
    %v164 = vadd.f32 %v140, %v163
    %165 = vdwg.mxu0
    %vm166 = vcmask 31744
    %v167 = vsel %vm166, %v164, -inf
    %168 = vmax.xlane.f32.xlu0 %v167
    %v169 = vpop.xlane.xlu0 %168
    %v170 = vsub.f32 %v164, %v169
    %v171 = vmul.f32 %v170, 1.442695
    %v172 = vpow.pop %v171
    %v173 = vsel %vm166, %v172, 0.0
    %174 = vadd.xlane.f32.xlu0 %v173
    %v175 = vpop.xlane.xlu0 %174
    %v176 = vrcp.pop %v175
    %v177 = vmul.f32 %v172, %v176
    %179 = vset.pattern.permute.xlu0 0
    %180 = vperm.xlu0 %179, %v177
    %v181 = vpop.permute.xlu0 %180
    %v191 = vrot.slane %v127, 7
    %vm192 = vcmask 1041409
    %v193 = vsel %vm192, %v191, %v126
    %v194 = vrot.slane %v128, 6
    %vm195 = vcmask 1042434
    %v196 = vsel %vm195, %v194, %v193
    %v197 = vrot.slane %v129, 5
    %vm198 = vcmask 1043459
    %v199 = vsel %vm198, %v197, %v196
    %v200 = vrot.slane %v130, 4
    %vm201 = vcmask 1044484
    %v202 = vsel %vm201, %v200, %v199
    %v203 = vrot.slane %v131, 3
    %vm204 = vcmask 1045509
    %v205 = vsel %vm204, %v203, %v202
    %v206 = vrot.slane %v132, 2
    %vm207 = vcmask 1046534
    %v208 = vsel %vm207, %v206, %v205
    %v209 = vrot.slane %v133, 1
    %vm210 = vcmask 1047559
    %v211 = vsel %vm210, %v209, %v208
    %v213 = vmul.f32 %v181, %v211
    %214 = vset.pattern.permute.xlu0 1
    %215 = vperm.xlu0 %214, %v177
    %v216 = vpop.permute.xlu0 %215
    %v218 = vrot.slane %v126, 1
    %v219 = vsel %vm192, %v127, %v218
    %v220 = vrot.slane %v128, 7
    %v221 = vsel %vm195, %v220, %v219
    %v222 = vrot.slane %v129, 6
    %v223 = vsel %vm198, %v222, %v221
    %v224 = vrot.slane %v130, 5
    %v225 = vsel %vm201, %v224, %v223
    %v226 = vrot.slane %v131, 4
    %v227 = vsel %vm204, %v226, %v225
    %v228 = vrot.slane %v132, 3
    %v229 = vsel %vm207, %v228, %v227
    %v230 = vrot.slane %v133, 2
    %v231 = vsel %vm210, %v230, %v229
    %v233 = vmul.f32 %v216, %v231
    %v234 = vadd.f32 %v213, %v233
    %235 = vset.pattern.permute.xlu0 2
    %236 = vperm.xlu0 %235, %v177
    %v237 = vpop.permute.xlu0 %236
    %v239 = vrot.slane %v126, 2
    %v240 = vrot.slane %v127, 1
    %v241 = vsel %vm192, %v240, %v239
    %v242 = vsel %vm195, %v128, %v241
    %v243 = vrot.slane %v129, 7
    %v244 = vsel %vm198, %v243, %v242
    %v245 = vrot.slane %v130, 6
    %v246 = vsel %vm201, %v245, %v244
    %v247 = vrot.slane %v131, 5
    %v248 = vsel %vm204, %v247, %v246
    %v249 = vrot.slane %v132, 4
    %v250 = vsel %vm207, %v249, %v248
    %v251 = vrot.slane %v133, 3
    %v252 = vsel %vm210, %v251, %v250
    %v254 = vmul.f32 %v237, %v252
    %v255 = vadd.f32 %v234, %v254
    %256 = vset.pattern.permute.xlu0 3
    %257 = vperm.xlu0 %256, %v177
    %v258 = vpop.permute.xlu0 %257
    %v260 = vrot.slane %v126, 3
    %v261 = vrot.slane %v127, 2
    %v262 = vsel %vm192, %v261, %v260
    %v263 = vrot.slane %v128, 1
    %v264 = vsel %vm195, %v263, %v262
    %v265 = vsel %vm198, %v129, %v264
    %v266 = vrot.slane %v130, 7
    %v267 = vsel %vm201, %v266, %v265
    %v268 = vrot.slane %v131, 6
    %v269 = vsel %vm204, %v268, %v267
    %v270 = vrot.slane %v132, 5
    %v271 = vsel %vm207, %v270, %v269
    %v272 = vrot.slane %v133, 4
    %v273 = vsel %vm210, %v272, %v271
    %v275 = vmul.f32 %v258, %v273
    %v276 = vadd.f32 %v255, %v275
    %v277 = vpack.c.bf16 %v276, %v125
    %v278 = vld [vmem:[#allocation5] sm:$0xf]
    %v279 = vld [vmem:[#allocation5 + $0x4] sm:$0xf]
    %v280 = vld [vmem:[#allocation5 + $0x8] sm:$0xf]
    %v281 = vld [vmem:[#allocation5 + $0xc] sm:$0xf]
    %v286 = vunpack.c.l.b16 %v278
    %v287 = vunpack.c.l.b16 %v279
    %v288 = vunpack.c.l.b16 %v280
    %v289 = vunpack.c.l.b16 %v281
    %v290 = vpack.c.b16 %v287, %v286
    %v291 = vpack.c.b16 %v289, %v288
    %v295 = vsel %vm142, %v277, 0
    %297 = vmatpush.bf16.msra.mxu0 0
    %298 = vmatpush.bf16.msra.mxu0 0
    %299 = vmatpush.bf16.msra.mxu0 0
    %300 = vmatpush.bf16.msra.mxu0 0
    %301 = vmatpush.bf16.msra.mxu0 0
    %302 = vmatpush.bf16.msra.mxu0 0
    %303 = vmatpush.bf16.msra.mxu0 %v291
    %304 = vmatpush.bf16.msra.mxu0 %v290
    %305 = vmatmul.bf16.gmra.mxu0 %v295
    %v306 = vpop.f32.mrf.mxu0
    %v307 = vadd.f32 0.0, %v306
    %v308 = vpop.f32.mrf.mxu0
    %v309 = vadd.f32 0.0, %v308
    %310 = vdwg.mxu0
    %v311 = vld [vmem:[%s5] sm:$0x1]
    %v312 = vld [vmem:[%s6] sm:$0x1]
    %v313 = vrot.slane %v307, 4
    %v314 = vadd.f32 %v307, %v313
    %v315 = vrot.slane %v314, 2
    %v316 = vadd.f32 %v314, %v315
    %v317 = vrot.slane %v316, 1
    %v318 = vadd.f32 %v316, %v317
    %v319 = vrot.slane %v309, 4
    %v320 = vadd.f32 %v309, %v319
    %v321 = vrot.slane %v320, 2
    %v322 = vadd.f32 %v320, %v321
    %v323 = vrot.slane %v322, 1
    %v324 = vadd.f32 %v322, %v323
    %v325 = vrcp.pop 8.0
    %v326 = vmul.f32 8.0, %v325
    %v327 = vsub.f32 1.0, %v326
    %v328 = vmul.f32 %v325, %v327
    %v329 = vadd.f32 %v325, %v328
    %vm330 = vweird.f32 %v325
    %v331 = vsel %vm330, %v325, %v329
    %v332 = vmul.f32 %v318, %v331
    %v333 = vmul.f32 %v324, %v331
    %v334 = vmul.f32 %v307, %v307
    %v335 = vmul.f32 %v309, %v309
    %v336 = vrot.slane %v334, 4
    %v337 = vadd.f32 %v334, %v336
    %v338 = vrot.slane %v337, 2
    %v339 = vadd.f32 %v337, %v338
    %v340 = vrot.slane %v339, 1
    %v341 = vadd.f32 %v339, %v340
    %v342 = vrot.slane %v335, 4
    %v343 = vadd.f32 %v335, %v342
    %v344 = vrot.slane %v343, 2
    %v345 = vadd.f32 %v343, %v344
    %v346 = vrot.slane %v345, 1
    %v347 = vadd.f32 %v345, %v346
    %v348 = vmul.f32 %v341, %v331
    %v349 = vmul.f32 %v347, %v331
    %v350 = vmul.f32 %v332, %v332
    %v351 = vmul.f32 %v333, %v333
    %v352 = vsub.f32 %v348, %v350
    %v353 = vsub.f32 %v349, %v351
    %v354 = vsub.f32 %v307, %v332
    %v355 = vsub.f32 %v309, %v333
    %v356 = vadd.f32 %v352, 1e-05
    %v357 = vadd.f32 %v353, 1e-05
    %v358 = vrsqrt.pop %v356
    %v359 = vmul.f32 %v358, %v356
    %v360 = vmul.f32 %v359, %v358
    %v361 = vmul.f32 0.5, %v360
    %v362 = vsub.f32 1.5, %v361
    %v363 = vmul.f32 %v358, %v362
    %vm364 = vweird.f32 %v356
    %vm365 = vweird.f32 %v358
    %vm366 = vmor %vm364, %vm365
    %v367 = vsel %vm366, %v358, %v363
    %v368 = vrsqrt.pop %v357
    %v369 = vmul.f32 %v368, %v357
    %v370 = vmul.f32 %v369, %v368
    %v371 = vmul.f32 0.5, %v370
    %v372 = vsub.f32 1.5, %v371
    %v373 = vmul.f32 %v368, %v372
    %vm374 = vweird.f32 %v357
    %vm375 = vweird.f32 %v368
    %vm376 = vmor %vm374, %vm375
    %v377 = vsel %vm376, %v368, %v373
    %v378 = vmul.f32 %v354, %v367
    %v379 = vmul.f32 %v355, %v377
    %v381 = vperm.slane %v311, 0
    %v383 = vmul.f32 %v378, %v381
    %v384 = vmul.f32 %v379, %v381
    %v386 = vperm.slane %v312, 0
    %v388 = vadd.f32 %v383, %v386
    %v389 = vadd.f32 %v384, %v386
    %v390 = vmax.f32 %v388, 0.0
    %v391 = vmax.f32 %v389, 0.0
    %v392 = vpack.c.bf16 %v391, %v390
    %v393 = vld [vmem:[#allocation7] sm:$0xf]
    %v394 = vld [vmem:[#allocation7 + $0x4] sm:$0xf]
    %v395 = vld [vmem:[#allocation7 + $0x8] sm:$0xf]
    %v396 = vld [vmem:[#allocation7 + $0xc] sm:$0xf]
    %v397 = vld [vmem:[#allocation7 + $0x10] sm:$0xf]
    %v398 = vld [vmem:[#allocation7 + $0x14] sm:$0xf]
    %v399 = vld [vmem:[#allocation7 + $0x18] sm:$0xf]
    %v400 = vld [vmem:[#allocation7 + $0x1c] sm:$0xf]
    %v401 = vld [vmem:[#allocation7 + $0x20] sm:$0xf]
    %v402 = vld [vmem:[#allocation7 + $0x24] sm:$0xf]
    %v403 = vld [vmem:[#allocation7 + $0x28] sm:$0xf]
    %v404 = vld [vmem:[#allocation7 + $0x2c] sm:$0xf]
    %v405 = vld [vmem:[#allocation7 + $0x30] sm:$0xf]
    %v406 = vld [vmem:[#allocation7 + $0x34] sm:$0xf]
    %v407 = vld [vmem:[#allocation7 + $0x38] sm:$0xf]
    %v408 = vld [vmem:[#allocation7 + $0x3c] sm:$0xf]
    %v409 = vld [vmem:[%s8] sm:$0x1]
    %v411 = vperm.slane %v409, 0
    %v429 = vunpack.c.l.b16 %v393
    %v430 = vunpack.c.l.b16 %v394
    %v431 = vunpack.c.l.b16 %v395
    %v432 = vunpack.c.l.b16 %v396
    %v433 = vunpack.c.l.b16 %v397
    %v434 = vunpack.c.l.b16 %v398
    %v435 = vunpack.c.l.b16 %v399
    %v436 = vunpack.c.l.b16 %v400
    %v437 = vunpack.c.l.b16 %v401
    %v438 = vunpack.c.l.b16 %v402
    %v439 = vunpack.c.l.b16 %v403
    %v440 = vunpack.c.l.b16 %v404
    %v441 = vunpack.c.l.b16 %v405
    %v442 = vunpack.c.l.b16 %v406
    %v443 = vunpack.c.l.b16 %v407
    %v444 = vunpack.c.l.b16 %v408
    %v445 = vpack.c.b16 %v430, %v429
    %v446 = vpack.c.b16 %v432, %v431
    %v447 = vpack.c.b16 %v434, %v433
    %v448 = vpack.c.b16 %v436, %v435
    %v449 = vpack.c.b16 %v438, %v437
    %v450 = vpack.c.b16 %v440, %v439
    %v451 = vpack.c.b16 %v442, %v441
    %v452 = vpack.c.b16 %v444, %v443
    %461 = vmatpush.bf16.msra.mxu0 %v452
    %462 = vmatpush.bf16.msra.mxu0 %v451
    %463 = vmatpush.bf16.msra.mxu0 %v450
    %464 = vmatpush.bf16.msra.mxu0 %v449
    %465 = vmatpush.bf16.msra.mxu0 %v448
    %466 = vmatpush.bf16.msra.mxu0 %v447
    %467 = vmatpush.bf16.msra.mxu0 %v446
    %468 = vmatpush.bf16.msra.mxu0 %v445
    %469 = vmatmul.bf16.gmra.mxu0 %v392
    %v470 = vpop.f32.mrf.mxu0
    %v471 = vadd.f32 %v411, %v470
    %v472 = vpop.f32.mrf.mxu0
    %v473 = vadd.f32 %v411, %v472
    %474 = vdwg.mxu0
    %v475 = vld [vmem:[%s9] sm:$0x1]
    %v476 = vld [vmem:[%s10] sm:$0x1]
    %v477 = vrot.slane %v471, 4
    %v478 = vadd.f32 %v471, %v477
    %v479 = vrot.slane %v478, 2
    %v480 = vadd.f32 %v478, %v479
    %v481 = vrot.slane %v480, 1
    %v482 = vadd.f32 %v480, %v481
    %v483 = vrot.slane %v473, 4
    %v484 = vadd.f32 %v473, %v483
    %v485 = vrot.slane %v484, 2
    %v486 = vadd.f32 %v484, %v485
    %v487 = vrot.slane %v486, 1
    %v488 = vadd.f32 %v486, %v487
    %v489 = vmul.f32 %v482, %v331
    %v490 = vmul.f32 %v488, %v331
    %v491 = vmul.f32 %v471, %v471
    %v492 = vmul.f32 %v473, %v473
    %v493 = vrot.slane %v491, 4
    %v494 = vadd.f32 %v491, %v493
    %v495 = vrot.slane %v494, 2
    %v496 = vadd.f32 %v494, %v495
    %v497 = vrot.slane %v496, 1
    %v498 = vadd.f32 %v496, %v497
    %v499 = vrot.slane %v492, 4
    %v500 = vadd.f32 %v492, %v499
    %v501 = vrot.slane %v500, 2
    %v502 = vadd.f32 %v500, %v501
    %v503 = vrot.slane %v502, 1
    %v504 = vadd.f32 %v502, %v503
    %v505 = vmul.f32 %v498, %v331
    %v506 = vmul.f32 %v504, %v331
    %v507 = vmul.f32 %v489, %v489
    %v508 = vmul.f32 %v490, %v490
    %v509 = vsub.f32 %v505, %v507
    %v510 = vsub.f32 %v506, %v508
    %v511 = vsub.f32 %v471, %v489
    %v512 = vsub.f32 %v473, %v490
    %v513 = vadd.f32 %v509, 1e-05
    %v514 = vadd.f32 %v510, 1e-05
    %v515 = vrsqrt.pop %v513
    %v516 = vmul.f32 %v515, %v513
    %v517 = vmul.f32 %v516, %v515
    %v518 = vmul.f32 0.5, %v517
    %v519 = vsub.f32 1.5, %v518
    %v520 = vmul.f32 %v515, %v519
    %vm521 = vweird.f32 %v513
    %vm522 = vweird.f32 %v515
    %vm523 = vmor %vm521, %vm522
    %v524 = vsel %vm523, %v515, %v520
    %v525 = vrsqrt.pop %v514
    %v526 = vmul.f32 %v525, %v514
    %v527 = vmul.f32 %v526, %v525
    %v528 = vmul.f32 0.5, %v527
    %v529 = vsub.f32 1.5, %v528
    %v530 = vmul.f32 %v525, %v529
    %vm531 = vweird.f32 %v514
    %vm532 = vweird.f32 %v525
    %vm533 = vmor %vm531, %vm532
    %v534 = vsel %vm533, %v525, %v530
    %v535 = vmul.f32 %v511, %v524
    %v536 = vmul.f32 %v512, %v534
    %v538 = vperm.slane %v475, 0
    %v540 = vmul.f32 %v535, %v538
    %v541 = vmul.f32 %v536, %v538
    %v543 = vperm.slane %v476, 0
    %v545 = vadd.f32 %v540, %v543
    %v546 = vadd.f32 %v541, %v543
    %547 = vst [vmem:[#allocation11] sm:$0xff] %v545
    %548 = vst [vmem:[#allocation11 + $0x8] sm:$0xff] %v546
    %v549 = vpack.c.bf16 %v546, %v545
    %v550 = vld [vmem:[#allocation8] sm:$0xf]
    %v551 = vld [vmem:[#allocation8 + $0x4] sm:$0xf]
    %v552 = vld [vmem:[#allocation8 + $0x8] sm:$0xf]
    %v553 = vld [vmem:[#allocation8 + $0xc] sm:$0xf]
    %v554 = vld [vmem:[#allocation8 + $0x10] sm:$0xf]
    %v555 = vld [vmem:[#allocation8 + $0x14] sm:$0xf]
    %v556 = vld [vmem:[#allocation8 + $0x18] sm:$0xf]
    %v557 = vld [vmem:[#allocation8 + $0x1c] sm:$0xf]
    %v558 = vld [vmem:[#allocation8 + $0x20] sm:$0xf]
    %v559 = vld [vmem:[#allocation8 + $0x24] sm:$0xf]
    %v560 = vld [vmem:[#allocation8 + $0x28] sm:$0xf]
    %v561 = vld [vmem:[#allocation8 + $0x2c] sm:$0xf]
    %v562 = vld [vmem:[#allocation8 + $0x30] sm:$0xf]
    %v563 = vld [vmem:[#allocation8 + $0x34] sm:$0xf]
    %v564 = vld [vmem:[#allocation8 + $0x38] sm:$0xf]
    %v565 = vld [vmem:[#allocation8 + $0x3c] sm:$0xf]
    %v582 = vunpack.c.l.b16 %v550
    %v583 = vunpack.c.l.b16 %v551
    %v584 = vunpack.c.l.b16 %v552
    %v585 = vunpack.c.l.b16 %v553
    %v586 = vunpack.c.l.b16 %v554
    %v587 = vunpack.c.l.b16 %v555
    %v588 = vunpack.c.l.b16 %v556
    %v589 = vunpack.c.l.b16 %v557
    %v590 = vunpack.c.l.b16 %v558
    %v591 = vunpack.c.l.b16 %v559
    %v592 = vunpack.c.l.b16 %v560
    %v593 = vunpack.c.l.b16 %v561
    %v594 = vunpack.c.l.b16 %v562
    %v595 = vunpack.c.l.b16 %v563
    %v596 = vunpack.c.l.b16 %v564
    %v597 = vunpack.c.l.b16 %v565
    %v598 = vpack.c.b16 %v583, %v582
    %v599 = vpack.c.b16 %v585, %v584
    %v600 = vpack.c.b16 %v587, %v586
    %v601 = vpack.c.b16 %v589, %v588
    %v602 = vpack.c.b16 %v591, %v590
    %v603 = vpack.c.b16 %v593, %v592
    %v604 = vpack.c.b16 %v595, %v594
    %v605 = vpack.c.b16 %v597, %v596
    %614 = vmatpush.bf16.msra.mxu0 %v605
    %615 = vmatpush.bf16.msra.mxu0 %v604
    %616 = vmatpush.bf16.msra.mxu0 %v603
    %617 = vmatpush.bf16.msra.mxu0 %v602
    %618 = vmatpush.bf16.msra.mxu0 %v601
    %619 = vmatpush.bf16.msra.mxu0 %v600
    %620 = vmatpush.bf16.msra.mxu0 %v599
    %621 = vmatpush.bf16.msra.mxu0 %v598
    %622 = vmatmul.bf16.gmra.mxu0 %v549
    %v623 = vpop.f32.mrf.mxu0
    %v624 = vadd.f32 0.0, %v623
    %v625 = vpop.f32.mrf.mxu0
    %v626 = vadd.f32 0.0, %v625
    %627 = vdwg.mxu0
    %v628 = vmax.f32 %v624, 0.0
    %v629 = vmax.f32 %v626, 0.0
    %v630 = vpack.c.bf16 %v629, %v628
    %v631 = vld [vmem:[#allocation10] sm:$0xf]
    %v632 = vld [vmem:[#allocation10 + $0x4] sm:$0xf]
    %v633 = vld [vmem:[#allocation10 + $0x8] sm:$0xf]
    %v634 = vld [vmem:[#allocation10 + $0xc] sm:$0xf]
    %v635 = vld [vmem:[#allocation10 + $0x10] sm:$0xf]
    %v636 = vld [vmem:[#allocation10 + $0x14] sm:$0xf]
    %v637 = vld [vmem:[#allocation10 + $0x18] sm:$0xf]
    %v638 = vld [vmem:[#allocation10 + $0x1c] sm:$0xf]
    %v639 = vld [vmem:[#allocation10 + $0x20] sm:$0xf]
    %v640 = vld [vmem:[#allocation10 + $0x24] sm:$0xf]
    %v641 = vld [vmem:[#allocation10 + $0x28] sm:$0xf]
    %v642 = vld [vmem:[#allocation10 + $0x2c] sm:$0xf]
    %v643 = vld [vmem:[#allocation10 + $0x30] sm:$0xf]
    %v644 = vld [vmem:[#allocation10 + $0x34] sm:$0xf]
    %v645 = vld [vmem:[#allocation10 + $0x38] sm:$0xf]
    %v646 = vld [vmem:[#allocation10 + $0x3c] sm:$0xf]
    %v663 = vunpack.c.l.b16 %v631
    %v664 = vunpack.c.l.b16 %v632
    %v665 = vunpack.c.l.b16 %v633
    %v666 = vunpack.c.l.b16 %v634
    %v667 = vunpack.c.l.b16 %v635
    %v668 = vunpack.c.l.b16 %v636
    %v669 = vunpack.c.l.b16 %v637
    %v670 = vunpack.c.l.b16 %v638
    %v671 = vunpack.c.l.b16 %v639
    %v672 = vunpack.c.l.b16 %v640
    %v673 = vunpack.c.l.b16 %v641
    %v674 = vunpack.c.l.b16 %v642
    %v675 = vunpack.c.l.b16 %v643
    %v676 = vunpack.c.l.b16 %v644
    %v677 = vunpack.c.l.b16 %v645
    %v678 = vunpack.c.l.b16 %v646
    %v679 = vpack.c.b16 %v664, %v663
    %v680 = vpack.c.b16 %v666, %v665
    %v681 = vpack.c.b16 %v668, %v667
    %v682 = vpack.c.b16 %v670, %v669
    %v683 = vpack.c.b16 %v672, %v671
    %v684 = vpack.c.b16 %v674, %v673
    %v685 = vpack.c.b16 %v676, %v675
    %v686 = vpack.c.b16 %v678, %v677
    %695 = vmatpush.bf16.msra.mxu0 %v686
    %696 = vmatpush.bf16.msra.mxu0 %v685
    %697 = vmatpush.bf16.msra.mxu0 %v684
    %698 = vmatpush.bf16.msra.mxu0 %v683
    %699 = vmatpush.bf16.msra.mxu0 %v682
    %700 = vmatpush.bf16.msra.mxu0 %v681
    %701 = vmatpush.bf16.msra.mxu0 %v680
    %702 = vmatpush.bf16.msra.mxu0 %v679
    %703 = vmatmul.bf16.gmra.mxu0 %v630
    %v704 = vpop.f32.mrf.mxu0
    %v705 = vadd.f32 0.0, %v704
    %v706 = vpop.f32.mrf.mxu0
    %v707 = vadd.f32 0.0, %v706
    %708 = vdwg.mxu0
    %709 = vst [vmem:[#allocation12] sm:$0xff] %v705
    %710 = vst [vmem:[#allocation12 + $0x8] sm:$0xff] %v707
    // Predicated region
    $region74: #{tpu_custom_call.1} parent=1 // pred_check
      _
    $region75: #{tpu_custom_call.1} parent=1 // pred_check_branch
      %712 = sbr.rel (0) target = $region77
    $region76: #{tpu_custom_call.1} parent=1 // pred_region
      %714 = vsyncadd [#allocation4], 0
      %s715 = sshll.u32 [#allocation11], 4
      %s716 = int_to_ptr.vmem [resolvable:$true] %s715
      %s717 = sshll.u32 %s13, 4
      %s718 = int_to_ptr.hbm [resolvable:$true] %s717
      %723 = dma.vmem_to_hbm [thread:$0]  %s716, 256, %s718, [#allocation4], 128, 128, 8
    $region77: #{tpu_custom_call.1} parent=1 // pred_fallthru
      _
    // Predicated region
    $region78: #{tpu_custom_call.1} parent=1 // pred_check
      _
    $region79: #{tpu_custom_call.1} parent=1 // pred_check_branch
      %725 = sbr.rel (0) target = $region81
    $region80: #{tpu_custom_call.1} parent=1 // pred_region
      %727 = vsyncadd [#allocation13], 0
      %s728 = sshll.u32 [#allocation12], 4
      %s729 = int_to_ptr.vmem [resolvable:$true] %s728
      %s730 = sshll.u32 %s14, 4
      %s731 = int_to_ptr.hbm [resolvable:$true] %s730
      %736 = dma.vmem_to_hbm [thread:$0]  %s729, 256, %s731, [#allocation13], 128, 128, 8
    $region81: #{tpu_custom_call.1} parent=1 // pred_fallthru
      _
    // Predicated region
    $region82: #{tpu_custom_call.1} parent=1 // pred_check
      _
    $region83: #{tpu_custom_call.1} parent=1 // pred_check_branch
      %738 = sbr.rel (0) target = $region85
    $region84: #{tpu_custom_call.1} parent=1 // pred_region
      %740 = dma.done [#allocation4], 256
    $region85: #{tpu_custom_call.1} parent=1 // pred_fallthru
      _
    // Predicated region
    $region86: #{tpu_custom_call.1} parent=1 // pred_check
      _
    $region87: #{tpu_custom_call.1} parent=1 // pred_check_branch
      %742 = sbr.rel (0) target = $region89
    $region88: #{tpu_custom_call.1} parent=1 // pred_region
      %744 = dma.done [#allocation13], 256
    $region89: #{tpu_custom_call.1} parent=1 // pred_fallthru
      _
    %745 = vsyncpa [#allocation3], 1
    %746 = vsyncpa [#allocation6], 1
    %747 = vsyncpa [#allocation9], 1
    %748 = vsyncpa [#allocation4], 1
    %749 = vsyncpa [#allocation13], 1

</llo_original>
